<compile_context>
chip_gen: v6e
topology: v6e:2x2x1
jax: 0.10.0
libtpu: 0.0.40
codegen_flags: <defaults>
</compile_context>

<pallas_src>
import functools

import jax
import jax.numpy as jnp
from jax.experimental import pallas as pl
from jax.experimental.pallas import tpu as pltpu


def _round_up(x, m):
    return (x + m - 1) // m * m


def actor_kernel(x_ref, w1_ref, b1_ref, w2_ref, b2_ref, wm_ref, bm_ref, wl_ref, bl_ref,
                 mean_ref, logstd_ref):
    """One batch tile of the whole MLP.  Weights/biases are VMEM-resident.

    Dots run on the MXU in the weights' storage dtype (bf16 or f32) with f32
    accumulation; all elementwise work (cast, bias add, ReLU, clamp) is f32 on the VPU
    (v5e-friendly: no bf16 VALU needed).
    """
    # In-kernel cast of the streamed input (rides a free VPU slot; no-op if f32).
    x = x_ref[...].astype(w1_ref.dtype)

    # fc1 + ReLU
    h1 = jnp.dot(x, w1_ref[...], preferred_element_type=jnp.float32) + b1_ref[...]
    h1 = jnp.maximum(h1, 0.0)

    # fc2 + ReLU
    h2 = jnp.dot(h1.astype(w2_ref.dtype), w2_ref[...],
                 preferred_element_type=jnp.float32) + b2_ref[...]
    h2 = jnp.maximum(h2, 0.0)
    h2c = h2.astype(wm_ref.dtype)

    # Two small head matmuls -> two lane-narrow outputs (no padded writeback, no slices).
    mean = jnp.dot(h2c, wm_ref[...], preferred_element_type=jnp.float32) + bm_ref[...]
    log_std = jnp.dot(h2c, wl_ref[...], preferred_element_type=jnp.float32) + bl_ref[...]

    mean_ref[...] = mean.astype(mean_ref.dtype)
    logstd_ref[...] = jnp.clip(log_std, -20.0, 2.0).astype(logstd_ref.dtype)


def actor_forward(x, params, *, tile_b=2048, compute_dtype=jnp.bfloat16):
    """x: [B, state_dim] f32 (passed to the kernel as-is, no wrapper cast/pad).

    params: dict of pre-transposed weights ([in, out]) and biases ([1, out]).
    Returns (mean, log_std), each [B, out_dim] f32, straight from the kernel outputs.
    """
    B, state_dim = x.shape
    hidden = params["w1"].shape[1]
    out_dim = params["wm"].shape[1]

    HP = _round_up(hidden, 128)  # lane-padded hidden width (use 256 multiple for v6e/v7x
                                 # if hidden >= 256; irrelevant at these sizes)
    cdt = compute_dtype

    def pad2(a, rows, cols):
        return jnp.pad(a, ((0, rows - a.shape[0]), (0, cols - a.shape[1])))

    # One-time weight packing (zero padding keeps the math exact).
    w1 = pad2(params["w1"], state_dim, HP).astype(cdt)
    b1 = pad2(params["b1"], 1, HP).astype(jnp.float32)
    w2 = pad2(params["w2"], HP, HP).astype(cdt)
    b2 = pad2(params["b2"], 1, HP).astype(jnp.float32)
    wm = pad2(params["wm"], HP, out_dim).astype(cdt)
    bm = params["bm"].astype(jnp.float32)
    wl = pad2(params["wl"], HP, out_dim).astype(cdt)
    bl = params["bl"].astype(jnp.float32)

    # Batch tiling: multiple of 8, and capped at ~cdiv(B, 2) so there are >= 2 grid
    # steps whenever B allows (keeps both v7x TensorCores busy).  Ragged last tile is
    # handled by the grid (out-of-bounds rows are masked on writeback), no padding of B.
    half = _round_up(-(-B // 2), 8)
    tile_b = max(8, min(int(tile_b), half))
    tile_b = _round_up(tile_b, 8)
    grid = (pl.cdiv(B, tile_b),)

    const = lambda i: (0, 0)  # weights/biases: same block every step (VMEM-resident)

    mean, log_std = pl.pallas_call(
        actor_kernel,
        out_shape=(jax.ShapeDtypeStruct((B, out_dim), jnp.float32),
                   jax.ShapeDtypeStruct((B, out_dim), jnp.float32)),
        grid=grid,
        in_specs=[
            pl.BlockSpec((tile_b, state_dim), lambda i: (i, 0)),  # x streamed per tile
            pl.BlockSpec((state_dim, HP), const),                 # w1
            pl.BlockSpec((1, HP), const),                         # b1
            pl.BlockSpec((HP, HP), const),                        # w2
            pl.BlockSpec((1, HP), const),                         # b2
            pl.BlockSpec((HP, out_dim), const),                   # wm (mean head)
            pl.BlockSpec((1, out_dim), const),                    # bm
            pl.BlockSpec((HP, out_dim), const),                   # wl (log_std head)
            pl.BlockSpec((1, out_dim), const),                    # bl
        ],
        out_specs=(
            pl.BlockSpec((tile_b, out_dim), lambda i: (i, 0)),    # mean
            pl.BlockSpec((tile_b, out_dim), lambda i: (i, 0)),    # log_std
        ),
        compiler_params=pltpu.CompilerParams(
            dimension_semantics=("parallel",),   # shard batch tiles across TCs (v7x)
            vmem_limit_bytes=32 * 1024 * 1024,   # explicit; fits v5e/v6e/v7x
        ),
    )(x, w1, b1, w2, b2, wm, bm, wl, bl)

    return mean, log_std


def init_params(key, state_dim, hidden_dim, output_dim, std=1.0, bias_const=1e-6):
    """Orthogonal init (mirrors torch.nn.init.orthogonal_ + constant bias).

    Weights stored as [in, out] (transpose of PyTorch's [out, in]).
    """
    ortho = jax.nn.initializers.orthogonal(scale=std)
    k1, k2, k3, k4 = jax.random.split(key, 4)

    def make(k, fan_in, fan_out):
        w_oi = ortho(k, (fan_out, fan_in), jnp.float32)  # [out, in] like torch
        b = jnp.full((1, fan_out), bias_const, dtype=jnp.float32)
        return w_oi.T, b

    w1, b1 = make(k1, state_dim, hidden_dim)
    w2, b2 = make(k2, hidden_dim, hidden_dim)
    wm, bm = make(k3, hidden_dim, output_dim)
    wl, bl = make(k4, hidden_dim, output_dim)
    return dict(w1=w1, b1=b1, w2=w2, b2=b2, wm=wm, bm=bm, wl=wl, bl=bl)


def actor_forward_ref(x, params, compute_dtype=jnp.float32):
    """Pure-JAX reference with the same dot-operand dtype policy as the kernel."""
    cdt = compute_dtype

    def dot(a, w):
        return jnp.dot(a.astype(cdt), w.astype(cdt), preferred_element_type=jnp.float32)

    h1 = jnp.maximum(dot(x, params["w1"]) + params["b1"], 0.0)
    h2 = jnp.maximum(dot(h1, params["w2"]) + params["b2"], 0.0)
    mean = dot(h2, params["wm"]) + params["bm"]
    log_std = jnp.clip(dot(h2, params["wl"]) + params["bl"], -20.0, 2.0)
    return mean, log_std


# TODO(synk): action()/evaluate() (Normal sampling, tanh squash, log_prob) are host-side
# policy utilities in the reference and are not part of the forward pass kernel.

if __name__ == "__main__":
    # Small shapes consistent with an RL actor: batch=8, state_dim=16,
    # hidden_dim=32, output_dim=8.
    B, STATE_DIM, HIDDEN_DIM, OUTPUT_DIM = 8, 16, 32, 8

    key = jax.random.PRNGKey(0)
    k_x, k_p = jax.random.split(key)

    x = jax.random.normal(k_x, (B, STATE_DIM), dtype=jnp.float32)
    params = init_params(k_p, STATE_DIM, HIDDEN_DIM, OUTPUT_DIM)

    # --- f32 MXU-operand path (exactness check against the reference) ---
    mean, log_std = actor_forward(x, params, compute_dtype=jnp.float32)
    jax.block_until_ready((mean, log_std))
    mean_ref, log_std_ref = actor_forward_ref(x, params, compute_dtype=jnp.float32)

    assert mean.shape == (B, OUTPUT_DIM) and log_std.shape == (B, OUTPUT_DIM)
    assert jnp.allclose(mean, mean_ref, atol=1e-5, rtol=1e-5)
    assert jnp.allclose(log_std, log_std_ref, atol=1e-5, rtol=1e-5)
    assert bool(jnp.all(log_std <= 2.0)) and bool(jnp.all(log_std >= -20.0))

    # --- bf16 MXU-operand path (default; recommended on all generations incl. v5e) ---
    mean_bf, log_std_bf = actor_forward(x, params)  # compute_dtype=bf16 default
    jax.block_until_ready((mean_bf, log_std_bf))
    mean_ref_bf, log_std_ref_bf = actor_forward_ref(x, params, compute_dtype=jnp.bfloat16)
    assert jnp.allclose(mean_bf, mean_ref_bf, atol=1e-2, rtol=1e-2)
    assert jnp.allclose(log_std_bf, log_std_ref_bf, atol=1e-2, rtol=1e-2)
    assert bool(jnp.all(log_std_bf <= 2.0)) and bool(jnp.all(log_std_bf >= -20.0))

    print("KERNEL_OK")
</pallas_src>

<mosaic_0001>
module attributes {stable_mosaic.version = 11 : i64} {
  func.func @actor_kernel(%arg0: i32, %arg1: memref<8x16xf32, #tpu.memory_space<vmem>>, %arg2: memref<16x128xf32, #tpu.memory_space<vmem>>, %arg3: memref<1x128xf32, #tpu.memory_space<vmem>>, %arg4: memref<128x128xf32, #tpu.memory_space<vmem>>, %arg5: memref<1x128xf32, #tpu.memory_space<vmem>>, %arg6: memref<128x8xf32, #tpu.memory_space<vmem>>, %arg7: memref<1x8xf32, #tpu.memory_space<vmem>>, %arg8: memref<128x8xf32, #tpu.memory_space<vmem>>, %arg9: memref<1x8xf32, #tpu.memory_space<vmem>>, %arg10: memref<8x8xf32, #tpu.memory_space<vmem>>, %arg11: memref<8x8xf32, #tpu.memory_space<vmem>>) attributes {dimension_semantics = [#tpu.dimension_semantics<parallel>], iteration_bounds = array<i64: 1>, scalar_prefetch = 0 : i64, scratch_operands = 0 : i64, tpu.core_type = #tpu.core_type<tc>, window_params = [{transform_indices = @transform_0, window_bounds = array<i64: 8, 16>}, {pipeline_mode = #tpu.pipeline_mode<synchronous>, transform_indices = @transform_1, window_bounds = array<i64: 16, 128>}, {pipeline_mode = #tpu.pipeline_mode<synchronous>, transform_indices = @transform_2, window_bounds = array<i64: 1, 128>}, {pipeline_mode = #tpu.pipeline_mode<synchronous>, transform_indices = @transform_3, window_bounds = array<i64: 128, 128>}, {pipeline_mode = #tpu.pipeline_mode<synchronous>, transform_indices = @transform_4, window_bounds = array<i64: 1, 128>}, {pipeline_mode = #tpu.pipeline_mode<synchronous>, transform_indices = @transform_5, window_bounds = array<i64: 128, 8>}, {pipeline_mode = #tpu.pipeline_mode<synchronous>, transform_indices = @transform_6, window_bounds = array<i64: 1, 8>}, {pipeline_mode = #tpu.pipeline_mode<synchronous>, transform_indices = @transform_7, window_bounds = array<i64: 128, 8>}, {pipeline_mode = #tpu.pipeline_mode<synchronous>, transform_indices = @transform_8, window_bounds = array<i64: 1, 8>}, {transform_indices = @transform_9, window_bounds = array<i64: 8, 8>}, {transform_indices = @transform_10, window_bounds = array<i64: 8, 8>}]} {
    %c0 = arith.constant 0 : index
    %c0_0 = arith.constant 0 : index
    %0 = vector.load %arg1[%c0, %c0_0] : memref<8x16xf32, #tpu.memory_space<vmem>>, vector<8x16xf32>
    %c0_1 = arith.constant 0 : index
    %c0_2 = arith.constant 0 : index
    %1 = vector.load %arg2[%c0_1, %c0_2] : memref<16x128xf32, #tpu.memory_space<vmem>>, vector<16x128xf32>
    %cst = arith.constant dense<0.000000e+00> : vector<8x128xf32>
    %2 = tpu.matmul %0, %1, %cst {dimension_numbers = #tpu.dot_dimension_numbers<[1], [0], [0], [1], [0, 0, 1, 1], [], []>} : vector<8x16xf32>, vector<16x128xf32>, vector<8x128xf32> -> vector<8x128xf32>
    %c0_3 = arith.constant 0 : index
    %c0_4 = arith.constant 0 : index
    %3 = vector.load %arg3[%c0_3, %c0_4] : memref<1x128xf32, #tpu.memory_space<vmem>>, vector<1x128xf32>
    %4 = vector.broadcast %3 : vector<1x128xf32> to vector<8x128xf32>
    %5 = arith.addf %2, %4 : vector<8x128xf32>
    %cst_5 = arith.constant 0.000000e+00 : f32
    %6 = vector.broadcast %cst_5 : f32 to vector<8x128xf32>
    %7 = arith.maximumf %5, %6 : vector<8x128xf32>
    %c0_6 = arith.constant 0 : index
    %c0_7 = arith.constant 0 : index
    %8 = vector.load %arg4[%c0_6, %c0_7] : memref<128x128xf32, #tpu.memory_space<vmem>>, vector<128x128xf32>
    %cst_8 = arith.constant dense<0.000000e+00> : vector<8x128xf32>
    %9 = tpu.matmul %7, %8, %cst_8 {dimension_numbers = #tpu.dot_dimension_numbers<[1], [0], [0], [1], [0, 0, 1, 1], [], []>} : vector<8x128xf32>, vector<128x128xf32>, vector<8x128xf32> -> vector<8x128xf32>
    %c0_9 = arith.constant 0 : index
    %c0_10 = arith.constant 0 : index
    %10 = vector.load %arg5[%c0_9, %c0_10] : memref<1x128xf32, #tpu.memory_space<vmem>>, vector<1x128xf32>
    %11 = vector.broadcast %10 : vector<1x128xf32> to vector<8x128xf32>
    %12 = arith.addf %9, %11 : vector<8x128xf32>
    %cst_11 = arith.constant 0.000000e+00 : f32
    %13 = vector.broadcast %cst_11 : f32 to vector<8x128xf32>
    %14 = arith.maximumf %12, %13 : vector<8x128xf32>
    %c0_12 = arith.constant 0 : index
    %c0_13 = arith.constant 0 : index
    %15 = vector.load %arg6[%c0_12, %c0_13] : memref<128x8xf32, #tpu.memory_space<vmem>>, vector<128x8xf32>
    %cst_14 = arith.constant dense<0.000000e+00> : vector<8x8xf32>
    %16 = tpu.matmul %14, %15, %cst_14 {dimension_numbers = #tpu.dot_dimension_numbers<[1], [0], [0], [1], [0, 0, 1, 1], [], []>} : vector<8x128xf32>, vector<128x8xf32>, vector<8x8xf32> -> vector<8x8xf32>
    %c0_15 = arith.constant 0 : index
    %c0_16 = arith.constant 0 : index
    %17 = vector.load %arg7[%c0_15, %c0_16] : memref<1x8xf32, #tpu.memory_space<vmem>>, vector<1x8xf32>
    %18 = vector.broadcast %17 : vector<1x8xf32> to vector<8x8xf32>
    %19 = arith.addf %16, %18 : vector<8x8xf32>
    %c0_17 = arith.constant 0 : index
    %c0_18 = arith.constant 0 : index
    %20 = vector.load %arg8[%c0_17, %c0_18] : memref<128x8xf32, #tpu.memory_space<vmem>>, vector<128x8xf32>
    %cst_19 = arith.constant dense<0.000000e+00> : vector<8x8xf32>
    %21 = tpu.matmul %14, %20, %cst_19 {dimension_numbers = #tpu.dot_dimension_numbers<[1], [0], [0], [1], [0, 0, 1, 1], [], []>} : vector<8x128xf32>, vector<128x8xf32>, vector<8x8xf32> -> vector<8x8xf32>
    %c0_20 = arith.constant 0 : index
    %c0_21 = arith.constant 0 : index
    %22 = vector.load %arg9[%c0_20, %c0_21] : memref<1x8xf32, #tpu.memory_space<vmem>>, vector<1x8xf32>
    %23 = vector.broadcast %22 : vector<1x8xf32> to vector<8x8xf32>
    %24 = arith.addf %21, %23 : vector<8x8xf32>
    %c0_22 = arith.constant 0 : index
    %c0_23 = arith.constant 0 : index
    %25 = vector.load %arg10[%c0_22, %c0_23] : memref<8x8xf32, #tpu.memory_space<vmem>>, vector<8x8xf32>
    tpu.vector_store %arg10[%c0_22, %c0_23], %19 {strides = array<i32>} : memref<8x8xf32, #tpu.memory_space<vmem>>, vector<8x8xf32>,
    %cst_24 = arith.constant -2.000000e+01 : f32
    %cst_25 = arith.constant 2.000000e+00 : f32
    %26 = vector.broadcast %cst_24 : f32 to vector<8x8xf32>
    %27 = arith.maximumf %26, %24 : vector<8x8xf32>
    %28 = vector.broadcast %cst_25 : f32 to vector<8x8xf32>
    %29 = arith.minimumf %28, %27 : vector<8x8xf32>
    %c0_26 = arith.constant 0 : index
    %c0_27 = arith.constant 0 : index
    %30 = vector.load %arg11[%c0_26, %c0_27] : memref<8x8xf32, #tpu.memory_space<vmem>>, vector<8x8xf32>
    tpu.vector_store %arg11[%c0_26, %c0_27], %29 {strides = array<i32>} : memref<8x8xf32, #tpu.memory_space<vmem>>, vector<8x8xf32>,
    return
  }
  func.func @transform_0(%arg0: i32) -> (i32, i32) {
    %c0_i32 = arith.constant 0 : i32
    %c0_i32_0 = arith.constant 0 : i32
    return %arg0, %c0_i32 : i32, i32
  }
  func.func @transform_1(%arg0: i32) -> (i32, i32) {
    %c0_i32 = arith.constant 0 : i32
    %c0_i32_0 = arith.constant 0 : i32
    %c0_i32_1 = arith.constant 0 : i32
    return %c0_i32, %c0_i32_0 : i32, i32
  }
  func.func @transform_2(%arg0: i32) -> (i32, i32) {
    %c0_i32 = arith.constant 0 : i32
    %c0_i32_0 = arith.constant 0 : i32
    %c0_i32_1 = arith.constant 0 : i32
    return %c0_i32, %c0_i32_0 : i32, i32
  }
  func.func @transform_3(%arg0: i32) -> (i32, i32) {
    %c0_i32 = arith.constant 0 : i32
    %c0_i32_0 = arith.constant 0 : i32
    %c0_i32_1 = arith.constant 0 : i32
    return %c0_i32, %c0_i32_0 : i32, i32
  }
  func.func @transform_4(%arg0: i32) -> (i32, i32) {
    %c0_i32 = arith.constant 0 : i32
    %c0_i32_0 = arith.constant 0 : i32
    %c0_i32_1 = arith.constant 0 : i32
    return %c0_i32, %c0_i32_0 : i32, i32
  }
  func.func @transform_5(%arg0: i32) -> (i32, i32) {
    %c0_i32 = arith.constant 0 : i32
    %c0_i32_0 = arith.constant 0 : i32
    %c0_i32_1 = arith.constant 0 : i32
    return %c0_i32, %c0_i32_0 : i32, i32
  }
  func.func @transform_6(%arg0: i32) -> (i32, i32) {
    %c0_i32 = arith.constant 0 : i32
    %c0_i32_0 = arith.constant 0 : i32
    %c0_i32_1 = arith.constant 0 : i32
    return %c0_i32, %c0_i32_0 : i32, i32
  }
  func.func @transform_7(%arg0: i32) -> (i32, i32) {
    %c0_i32 = arith.constant 0 : i32
    %c0_i32_0 = arith.constant 0 : i32
    %c0_i32_1 = arith.constant 0 : i32
    return %c0_i32, %c0_i32_0 : i32, i32
  }
  func.func @transform_8(%arg0: i32) -> (i32, i32) {
    %c0_i32 = arith.constant 0 : i32
    %c0_i32_0 = arith.constant 0 : i32
    %c0_i32_1 = arith.constant 0 : i32
    return %c0_i32, %c0_i32_0 : i32, i32
  }
  func.func @transform_9(%arg0: i32) -> (i32, i32) {
    %c0_i32 = arith.constant 0 : i32
    %c0_i32_0 = arith.constant 0 : i32
    return %arg0, %c0_i32 : i32, i32
  }
  func.func @transform_10(%arg0: i32) -> (i32, i32) {
    %c0_i32 = arith.constant 0 : i32
    %c0_i32_0 = arith.constant 0 : i32
    return %arg0, %c0_i32 : i32, i32
  }
}

</mosaic_0001>

<llo_original>
// kernel: tpu_custom_call.1
$region0: #{tpu_custom_call.1}
  #allocation0 [shape = 'u32[]', space=smem, size = 0x4, offset = 0x4, fixed_abs, tag = 'smem constant byte address 0x4 - core index']
  #allocation1 [shape = 'u32[144,128]{1,0:T(1,128)}', space=vmem, size = 0x12000, scoped, tag = 'internal scratch']
  %s0 = inlined_call_operand.vmem [shape: f32[8,16], index: 0, kind: input, shape index: {}]
  %s1 = inlined_call_operand.vmem [shape: f32[16,128], index: 1, kind: input, shape index: {}]
  %s2 = inlined_call_operand.vmem [shape: f32[1,128], index: 2, kind: input, shape index: {}]
  %s3 = inlined_call_operand.vmem [shape: f32[128,128], index: 3, kind: input, shape index: {}]
  %s4 = inlined_call_operand.vmem [shape: f32[1,128], index: 4, kind: input, shape index: {}]
  %s5 = inlined_call_operand.vmem [shape: f32[128,8], index: 5, kind: input, shape index: {}]
  %s6 = inlined_call_operand.vmem [shape: f32[1,8], index: 6, kind: input, shape index: {}]
  %s7 = inlined_call_operand.vmem [shape: f32[128,8], index: 7, kind: input, shape index: {}]
  %s8 = inlined_call_operand.vmem [shape: f32[1,8], index: 8, kind: input, shape index: {}]
  %s9 = inlined_call_operand.hbm [shape: f32[8,8], index: 9, kind: output, shape index: {0}]
  %s10 = inlined_call_operand.hbm [shape: f32[8,8], index: 10, kind: output, shape index: {1}]
  %11 = xla_tuple %s9, %s10
  %s12 = sld [smem:[#allocation0]]
  $region54: #{tpu_custom_call.1} parent=0
    _
  %s14 = ssub.s32 1, %s12
  %s15 = scalar_select 0, %s14, %s12
  $region1: #{tpu_custom_call.1} parent=0
    #allocation2 [shape = 'u8[4096]{0}', space=vmem, size = 0x1000, scoped, tag = 'output window, operand 0, single buffered']
    #allocation3 [shape = 's32[1]{0}', space=sflag, size = 0x4, scoped, tag = 'scoped memory for tpu_custom_call.1']
    #allocation4 [shape = 'u8[4096]{0}', space=vmem, size = 0x1000, scoped, tag = 'output window, operand 1, single buffered']
    #allocation5 [shape = 's32[1]{0}', space=sflag, size = 0x4, scoped, tag = 'scoped memory for tpu_custom_call.1']
    %16 = vsyncpa [#allocation3], 0
    %17 = vsyncpa [#allocation5], 0
    // Predicated region
    $region2: #{tpu_custom_call.1} parent=1 // pred_check
      _
    $region3: #{tpu_custom_call.1} parent=1 // pred_check_branch
      %19 = sbr.rel (0) target = $region5
    $region4: #{tpu_custom_call.1} parent=1 // pred_region
      _
    $region5: #{tpu_custom_call.1} parent=1 // pred_fallthru
      _
    // Predicated region
    $region6: #{tpu_custom_call.1} parent=1 // pred_check
      _
    $region7: #{tpu_custom_call.1} parent=1 // pred_check_branch
      %21 = sbr.rel (0) target = $region9
    $region8: #{tpu_custom_call.1} parent=1 // pred_region
      _
    $region9: #{tpu_custom_call.1} parent=1 // pred_fallthru
      _
    // Predicated region
    $region10: #{tpu_custom_call.1} parent=1 // pred_check
      _
    $region11: #{tpu_custom_call.1} parent=1 // pred_check_branch
      %23 = sbr.rel (0) target = $region13
    $region12: #{tpu_custom_call.1} parent=1 // pred_region
      _
    $region13: #{tpu_custom_call.1} parent=1 // pred_fallthru
      _
    // Predicated region
    $region14: #{tpu_custom_call.1} parent=1 // pred_check
      _
    $region15: #{tpu_custom_call.1} parent=1 // pred_check_branch
      %25 = sbr.rel (0) target = $region17
    $region16: #{tpu_custom_call.1} parent=1 // pred_region
      _
    $region17: #{tpu_custom_call.1} parent=1 // pred_fallthru
      _
    // Predicated region
    $region18: #{tpu_custom_call.1} parent=1 // pred_check
      _
    $region19: #{tpu_custom_call.1} parent=1 // pred_check_branch
      %27 = sbr.rel (0) target = $region21
    $region20: #{tpu_custom_call.1} parent=1 // pred_region
      _
    $region21: #{tpu_custom_call.1} parent=1 // pred_fallthru
      _
    // Predicated region
    $region22: #{tpu_custom_call.1} parent=1 // pred_check
      _
    $region23: #{tpu_custom_call.1} parent=1 // pred_check_branch
      %29 = sbr.rel (0) target = $region25
    $region24: #{tpu_custom_call.1} parent=1 // pred_region
      _
    $region25: #{tpu_custom_call.1} parent=1 // pred_fallthru
      _
    // Predicated region
    $region26: #{tpu_custom_call.1} parent=1 // pred_check
      _
    $region27: #{tpu_custom_call.1} parent=1 // pred_check_branch
      %31 = sbr.rel (0) target = $region29
    $region28: #{tpu_custom_call.1} parent=1 // pred_region
      _
    $region29: #{tpu_custom_call.1} parent=1 // pred_fallthru
      _
    // Predicated region
    $region30: #{tpu_custom_call.1} parent=1 // pred_check
      _
    $region31: #{tpu_custom_call.1} parent=1 // pred_check_branch
      %33 = sbr.rel (0) target = $region33
    $region32: #{tpu_custom_call.1} parent=1 // pred_region
      _
    $region33: #{tpu_custom_call.1} parent=1 // pred_fallthru
      _
    // Predicated region
    $region34: #{tpu_custom_call.1} parent=1 // pred_check
      _
    $region35: #{tpu_custom_call.1} parent=1 // pred_check_branch
      %35 = sbr.rel (0) target = $region37
    $region36: #{tpu_custom_call.1} parent=1 // pred_region
      _
    $region37: #{tpu_custom_call.1} parent=1 // pred_fallthru
      _
    %v36 = vld [vmem:[%s0] sm:$0xff]
    %v37 = vld [vmem:[%s1] sm:$0xff]
    %v38 = vld [vmem:[%s1 + $0x8] sm:$0xff]
    %v39 = vld [vmem:[%s2] sm:$0x1]
    %v41 = vlaneseq
    %v42 = vshrl.u32 %v41, 7
    %v43 = vsub.s32 0, %v42
    %v44 = vrot.slane %v39, %v43
    %vm46 = vcmask 130048
    %v48 = vsel %vm46, %v36, 0
    %50 = vmatprep.subr.mxu0 0.0
    %51 = vmatpush1.msra.mxu0 0.0
    %52 = vmatprep.subr.mxu0 0.0
    %53 = vmatpush1.msra.mxu0 0.0
    %54 = vmatprep.subr.mxu0 0.0
    %55 = vmatpush1.msra.mxu0 0.0
    %56 = vmatprep.subr.mxu0 0.0
    %57 = vmatpush1.msra.mxu0 0.0
    %58 = vmatprep.subr.mxu0 0.0
    %59 = vmatpush1.msra.mxu0 0.0
    %60 = vmatprep.subr.mxu0 0.0
    %61 = vmatpush1.msra.mxu0 0.0
    %62 = vmatprep.subr.mxu0 0.0
    %63 = vmatpush1.msra.mxu0 0.0
    %64 = vmatprep.subr.mxu0 0.0
    %65 = vmatpush1.msra.mxu0 0.0
    %66 = vmatprep.subr.mxu0 0.0
    %67 = vmatpush1.msra.mxu0 0.0
    %68 = vmatprep.subr.mxu0 0.0
    %69 = vmatpush1.msra.mxu0 0.0
    %70 = vmatprep.subr.mxu0 0.0
    %71 = vmatpush1.msra.mxu0 0.0
    %72 = vmatprep.subr.mxu0 0.0
    %73 = vmatpush1.msra.mxu0 0.0
    %74 = vmatprep.subr.mxu0 0.0
    %75 = vmatpush1.msra.mxu0 0.0
    %76 = vmatprep.subr.mxu0 0.0
    %77 = vmatpush1.msra.mxu0 0.0
    %78 = vmatprep.subr.mxu0 0.0
    %79 = vmatpush1.msra.mxu0 %v38
    %80 = vmatprep.subr.mxu0 0.0
    %81 = vmatpush1.msra.mxu0 %v37
    %82 = vmatprep.subr.mxu0 0.0
    %83 = vmatpush2.msra.mxu0 0.0
    %84 = vmatprep.subr.mxu0 0.0
    %85 = vmatpush2.msra.mxu0 0.0
    %86 = vmatprep.subr.mxu0 0.0
    %87 = vmatpush2.msra.mxu0 0.0
    %88 = vmatprep.subr.mxu0 0.0
    %89 = vmatpush2.msra.mxu0 0.0
    %90 = vmatprep.subr.mxu0 0.0
    %91 = vmatpush2.msra.mxu0 0.0
    %92 = vmatprep.subr.mxu0 0.0
    %93 = vmatpush2.msra.mxu0 0.0
    %94 = vmatprep.subr.mxu0 0.0
    %95 = vmatpush2.msra.mxu0 0.0
    %96 = vmatprep.subr.mxu0 0.0
    %97 = vmatpush2.msra.mxu0 0.0
    %98 = vmatprep.subr.mxu0 0.0
    %99 = vmatpush2.msra.mxu0 0.0
    %100 = vmatprep.subr.mxu0 0.0
    %101 = vmatpush2.msra.mxu0 0.0
    %102 = vmatprep.subr.mxu0 0.0
    %103 = vmatpush2.msra.mxu0 0.0
    %104 = vmatprep.subr.mxu0 0.0
    %105 = vmatpush2.msra.mxu0 0.0
    %106 = vmatprep.subr.mxu0 0.0
    %107 = vmatpush2.msra.mxu0 0.0
    %108 = vmatprep.subr.mxu0 0.0
    %109 = vmatpush2.msra.mxu0 0.0
    %110 = vmatprep.subr.mxu0 0.0
    %111 = vmatpush2.msra.mxu0 0.0
    %112 = vmatprep.subr.mxu0 0.0
    %113 = vmatpush2.msra.mxu0 0.0
    %114 = vmatprep.mubr.f32.mxu0 0.0
    %115 = vmatmul.mubr.f32.gmra.mxu0 %v48
    %v116 = vpop.f32.mrf.mxu0
    %v117 = vadd.f32 %v44, %v116
    %v118 = vpop.f32.mrf.mxu0
    %119 = vdwg.mxu0
    %v120 = vmax.f32 %v117, 0.0
    %v121 = vld [vmem:[%s3] sm:$0xff]
    %v122 = vld [vmem:[%s3 + $0x8] sm:$0xff]
    %v123 = vld [vmem:[%s3 + $0x10] sm:$0xff]
    %v124 = vld [vmem:[%s3 + $0x18] sm:$0xff]
    %v125 = vld [vmem:[%s3 + $0x20] sm:$0xff]
    %v126 = vld [vmem:[%s3 + $0x28] sm:$0xff]
    %v127 = vld [vmem:[%s3 + $0x30] sm:$0xff]
    %v128 = vld [vmem:[%s3 + $0x38] sm:$0xff]
    %v129 = vld [vmem:[%s3 + $0x40] sm:$0xff]
    %v130 = vld [vmem:[%s3 + $0x48] sm:$0xff]
    %v131 = vld [vmem:[%s3 + $0x50] sm:$0xff]
    %v132 = vld [vmem:[%s3 + $0x58] sm:$0xff]
    %v133 = vld [vmem:[%s3 + $0x60] sm:$0xff]
    %v134 = vld [vmem:[%s3 + $0x68] sm:$0xff]
    %v135 = vld [vmem:[%s3 + $0x70] sm:$0xff]
    %v136 = vld [vmem:[%s3 + $0x78] sm:$0xff]
    %v137 = vld [vmem:[%s4] sm:$0x1]
    %v139 = vlaneseq
    %v140 = vshrl.u32 %v139, 7
    %v141 = vsub.s32 0, %v140
    %v142 = vrot.slane %v137, %v141
    %144 = vmatprep.subr.mxu0 0.0
    %145 = vmatpush1.msra.mxu0 %v136
    %146 = vmatprep.subr.mxu0 0.0
    %147 = vmatpush1.msra.mxu0 %v135
    %148 = vmatprep.subr.mxu0 0.0
    %149 = vmatpush1.msra.mxu0 %v134
    %150 = vmatprep.subr.mxu0 0.0
    %151 = vmatpush1.msra.mxu0 %v133
    %152 = vmatprep.subr.mxu0 0.0
    %153 = vmatpush1.msra.mxu0 %v132
    %154 = vmatprep.subr.mxu0 0.0
    %155 = vmatpush1.msra.mxu0 %v131
    %156 = vmatprep.subr.mxu0 0.0
    %157 = vmatpush1.msra.mxu0 %v130
    %158 = vmatprep.subr.mxu0 0.0
    %159 = vmatpush1.msra.mxu0 %v129
    %160 = vmatprep.subr.mxu0 0.0
    %161 = vmatpush1.msra.mxu0 %v128
    %162 = vmatprep.subr.mxu0 0.0
    %163 = vmatpush1.msra.mxu0 %v127
    %164 = vmatprep.subr.mxu0 0.0
    %165 = vmatpush1.msra.mxu0 %v126
    %166 = vmatprep.subr.mxu0 0.0
    %167 = vmatpush1.msra.mxu0 %v125
    %168 = vmatprep.subr.mxu0 0.0
    %169 = vmatpush1.msra.mxu0 %v124
    %170 = vmatprep.subr.mxu0 0.0
    %171 = vmatpush1.msra.mxu0 %v123
    %172 = vmatprep.subr.mxu0 0.0
    %173 = vmatpush1.msra.mxu0 %v122
    %174 = vmatprep.subr.mxu0 0.0
    %175 = vmatpush1.msra.mxu0 %v121
    %176 = vmatprep.subr.mxu0 0.0
    %177 = vmatpush2.msra.mxu0 0.0
    %178 = vmatprep.subr.mxu0 0.0
    %179 = vmatpush2.msra.mxu0 0.0
    %180 = vmatprep.subr.mxu0 0.0
    %181 = vmatpush2.msra.mxu0 0.0
    %182 = vmatprep.subr.mxu0 0.0
    %183 = vmatpush2.msra.mxu0 0.0
    %184 = vmatprep.subr.mxu0 0.0
    %185 = vmatpush2.msra.mxu0 0.0
    %186 = vmatprep.subr.mxu0 0.0
    %187 = vmatpush2.msra.mxu0 0.0
    %188 = vmatprep.subr.mxu0 0.0
    %189 = vmatpush2.msra.mxu0 0.0
    %190 = vmatprep.subr.mxu0 0.0
    %191 = vmatpush2.msra.mxu0 0.0
    %192 = vmatprep.subr.mxu0 0.0
    %193 = vmatpush2.msra.mxu0 0.0
    %194 = vmatprep.subr.mxu0 0.0
    %195 = vmatpush2.msra.mxu0 0.0
    %196 = vmatprep.subr.mxu0 0.0
    %197 = vmatpush2.msra.mxu0 0.0
    %198 = vmatprep.subr.mxu0 0.0
    %199 = vmatpush2.msra.mxu0 0.0
    %200 = vmatprep.subr.mxu0 0.0
    %201 = vmatpush2.msra.mxu0 0.0
    %202 = vmatprep.subr.mxu0 0.0
    %203 = vmatpush2.msra.mxu0 0.0
    %204 = vmatprep.subr.mxu0 0.0
    %205 = vmatpush2.msra.mxu0 0.0
    %206 = vmatprep.subr.mxu0 0.0
    %207 = vmatpush2.msra.mxu0 0.0
    %208 = vmatprep.mubr.f32.mxu0 0.0
    %209 = vmatmul.mubr.f32.gmra.mxu0 %v120
    %v210 = vpop.f32.mrf.mxu0
    %v211 = vadd.f32 %v142, %v210
    %v212 = vpop.f32.mrf.mxu0
    %213 = vdwg.mxu0
    %v214 = vmax.f32 %v211, 0.0
    %v215 = vld [vmem:[%s5] sm:$0xff]
    %v216 = vld [vmem:[%s5 + $0x8] sm:$0xff]
    %v217 = vld [vmem:[%s5 + $0x10] sm:$0xff]
    %v218 = vld [vmem:[%s5 + $0x18] sm:$0xff]
    %v219 = vld [vmem:[%s5 + $0x20] sm:$0xff]
    %v220 = vld [vmem:[%s5 + $0x28] sm:$0xff]
    %v221 = vld [vmem:[%s5 + $0x30] sm:$0xff]
    %v222 = vld [vmem:[%s5 + $0x38] sm:$0xff]
    %v223 = vld [vmem:[%s5 + $0x40] sm:$0xff]
    %v224 = vld [vmem:[%s5 + $0x48] sm:$0xff]
    %v225 = vld [vmem:[%s5 + $0x50] sm:$0xff]
    %v226 = vld [vmem:[%s5 + $0x58] sm:$0xff]
    %v227 = vld [vmem:[%s5 + $0x60] sm:$0xff]
    %v228 = vld [vmem:[%s5 + $0x68] sm:$0xff]
    %v229 = vld [vmem:[%s5 + $0x70] sm:$0xff]
    %v230 = vld [vmem:[%s5 + $0x78] sm:$0xff]
    %v231 = vld [vmem:[%s6] sm:$0x1]
    %v233 = vlaneseq
    %v234 = vshrl.u32 %v233, 7
    %v235 = vsub.s32 0, %v234
    %v236 = vrot.slane %v231, %v235
    %238 = vmatprep.subr.mxu0 0.0
    %239 = vmatpush1.msra.mxu0 %v230
    %240 = vmatprep.subr.mxu0 0.0
    %241 = vmatpush1.msra.mxu0 %v229
    %242 = vmatprep.subr.mxu0 0.0
    %243 = vmatpush1.msra.mxu0 %v228
    %244 = vmatprep.subr.mxu0 0.0
    %245 = vmatpush1.msra.mxu0 %v227
    %246 = vmatprep.subr.mxu0 0.0
    %247 = vmatpush1.msra.mxu0 %v226
    %248 = vmatprep.subr.mxu0 0.0
    %249 = vmatpush1.msra.mxu0 %v225
    %250 = vmatprep.subr.mxu0 0.0
    %251 = vmatpush1.msra.mxu0 %v224
    %252 = vmatprep.subr.mxu0 0.0
    %253 = vmatpush1.msra.mxu0 %v223
    %254 = vmatprep.subr.mxu0 0.0
    %255 = vmatpush1.msra.mxu0 %v222
    %256 = vmatprep.subr.mxu0 0.0
    %257 = vmatpush1.msra.mxu0 %v221
    %258 = vmatprep.subr.mxu0 0.0
    %259 = vmatpush1.msra.mxu0 %v220
    %260 = vmatprep.subr.mxu0 0.0
    %261 = vmatpush1.msra.mxu0 %v219
    %262 = vmatprep.subr.mxu0 0.0
    %263 = vmatpush1.msra.mxu0 %v218
    %264 = vmatprep.subr.mxu0 0.0
    %265 = vmatpush1.msra.mxu0 %v217
    %266 = vmatprep.subr.mxu0 0.0
    %267 = vmatpush1.msra.mxu0 %v216
    %268 = vmatprep.subr.mxu0 0.0
    %269 = vmatpush1.msra.mxu0 %v215
    %270 = vmatprep.subr.mxu0 0.0
    %271 = vmatpush2.msra.mxu0 0.0
    %272 = vmatprep.subr.mxu0 0.0
    %273 = vmatpush2.msra.mxu0 0.0
    %274 = vmatprep.subr.mxu0 0.0
    %275 = vmatpush2.msra.mxu0 0.0
    %276 = vmatprep.subr.mxu0 0.0
    %277 = vmatpush2.msra.mxu0 0.0
    %278 = vmatprep.subr.mxu0 0.0
    %279 = vmatpush2.msra.mxu0 0.0
    %280 = vmatprep.subr.mxu0 0.0
    %281 = vmatpush2.msra.mxu0 0.0
    %282 = vmatprep.subr.mxu0 0.0
    %283 = vmatpush2.msra.mxu0 0.0
    %284 = vmatprep.subr.mxu0 0.0
    %285 = vmatpush2.msra.mxu0 0.0
    %286 = vmatprep.subr.mxu0 0.0
    %287 = vmatpush2.msra.mxu0 0.0
    %288 = vmatprep.subr.mxu0 0.0
    %289 = vmatpush2.msra.mxu0 0.0
    %290 = vmatprep.subr.mxu0 0.0
    %291 = vmatpush2.msra.mxu0 0.0
    %292 = vmatprep.subr.mxu0 0.0
    %293 = vmatpush2.msra.mxu0 0.0
    %294 = vmatprep.subr.mxu0 0.0
    %295 = vmatpush2.msra.mxu0 0.0
    %296 = vmatprep.subr.mxu0 0.0
    %297 = vmatpush2.msra.mxu0 0.0
    %298 = vmatprep.subr.mxu0 0.0
    %299 = vmatpush2.msra.mxu0 0.0
    %300 = vmatprep.subr.mxu0 0.0
    %301 = vmatpush2.msra.mxu0 0.0
    %302 = vmatprep.mubr.f32.mxu0 0.0
    %303 = vmatmul.mubr.f32.gmra.mxu0 %v214
    %v304 = vpop.f32.mrf.mxu0
    %v305 = vadd.f32 %v236, %v304
    %v306 = vpop.f32.mrf.mxu0
    %307 = vdwg.mxu0
    %v308 = vld [vmem:[%s7] sm:$0xff]
    %v309 = vld [vmem:[%s7 + $0x8] sm:$0xff]
    %v310 = vld [vmem:[%s7 + $0x10] sm:$0xff]
    %v311 = vld [vmem:[%s7 + $0x18] sm:$0xff]
    %v312 = vld [vmem:[%s7 + $0x20] sm:$0xff]
    %v313 = vld [vmem:[%s7 + $0x28] sm:$0xff]
    %v314 = vld [vmem:[%s7 + $0x30] sm:$0xff]
    %v315 = vld [vmem:[%s7 + $0x38] sm:$0xff]
    %v316 = vld [vmem:[%s7 + $0x40] sm:$0xff]
    %v317 = vld [vmem:[%s7 + $0x48] sm:$0xff]
    %v318 = vld [vmem:[%s7 + $0x50] sm:$0xff]
    %v319 = vld [vmem:[%s7 + $0x58] sm:$0xff]
    %v320 = vld [vmem:[%s7 + $0x60] sm:$0xff]
    %v321 = vld [vmem:[%s7 + $0x68] sm:$0xff]
    %v322 = vld [vmem:[%s7 + $0x70] sm:$0xff]
    %v323 = vld [vmem:[%s7 + $0x78] sm:$0xff]
    %v324 = vld [vmem:[%s8] sm:$0x1]
    %v326 = vlaneseq
    %v327 = vshrl.u32 %v326, 7
    %v328 = vsub.s32 0, %v327
    %v329 = vrot.slane %v324, %v328
    %331 = vmatprep.subr.mxu0 0.0
    %332 = vmatpush1.msra.mxu0 %v323
    %333 = vmatprep.subr.mxu0 0.0
    %334 = vmatpush1.msra.mxu0 %v322
    %335 = vmatprep.subr.mxu0 0.0
    %336 = vmatpush1.msra.mxu0 %v321
    %337 = vmatprep.subr.mxu0 0.0
    %338 = vmatpush1.msra.mxu0 %v320
    %339 = vmatprep.subr.mxu0 0.0
    %340 = vmatpush1.msra.mxu0 %v319
    %341 = vmatprep.subr.mxu0 0.0
    %342 = vmatpush1.msra.mxu0 %v318
    %343 = vmatprep.subr.mxu0 0.0
    %344 = vmatpush1.msra.mxu0 %v317
    %345 = vmatprep.subr.mxu0 0.0
    %346 = vmatpush1.msra.mxu0 %v316
    %347 = vmatprep.subr.mxu0 0.0
    %348 = vmatpush1.msra.mxu0 %v315
    %349 = vmatprep.subr.mxu0 0.0
    %350 = vmatpush1.msra.mxu0 %v314
    %351 = vmatprep.subr.mxu0 0.0
    %352 = vmatpush1.msra.mxu0 %v313
    %353 = vmatprep.subr.mxu0 0.0
    %354 = vmatpush1.msra.mxu0 %v312
    %355 = vmatprep.subr.mxu0 0.0
    %356 = vmatpush1.msra.mxu0 %v311
    %357 = vmatprep.subr.mxu0 0.0
    %358 = vmatpush1.msra.mxu0 %v310
    %359 = vmatprep.subr.mxu0 0.0
    %360 = vmatpush1.msra.mxu0 %v309
    %361 = vmatprep.subr.mxu0 0.0
    %362 = vmatpush1.msra.mxu0 %v308
    %363 = vmatprep.subr.mxu0 0.0
    %364 = vmatpush2.msra.mxu0 0.0
    %365 = vmatprep.subr.mxu0 0.0
    %366 = vmatpush2.msra.mxu0 0.0
    %367 = vmatprep.subr.mxu0 0.0
    %368 = vmatpush2.msra.mxu0 0.0
    %369 = vmatprep.subr.mxu0 0.0
    %370 = vmatpush2.msra.mxu0 0.0
    %371 = vmatprep.subr.mxu0 0.0
    %372 = vmatpush2.msra.mxu0 0.0
    %373 = vmatprep.subr.mxu0 0.0
    %374 = vmatpush2.msra.mxu0 0.0
    %375 = vmatprep.subr.mxu0 0.0
    %376 = vmatpush2.msra.mxu0 0.0
    %377 = vmatprep.subr.mxu0 0.0
    %378 = vmatpush2.msra.mxu0 0.0
    %379 = vmatprep.subr.mxu0 0.0
    %380 = vmatpush2.msra.mxu0 0.0
    %381 = vmatprep.subr.mxu0 0.0
    %382 = vmatpush2.msra.mxu0 0.0
    %383 = vmatprep.subr.mxu0 0.0
    %384 = vmatpush2.msra.mxu0 0.0
    %385 = vmatprep.subr.mxu0 0.0
    %386 = vmatpush2.msra.mxu0 0.0
    %387 = vmatprep.subr.mxu0 0.0
    %388 = vmatpush2.msra.mxu0 0.0
    %389 = vmatprep.subr.mxu0 0.0
    %390 = vmatpush2.msra.mxu0 0.0
    %391 = vmatprep.subr.mxu0 0.0
    %392 = vmatpush2.msra.mxu0 0.0
    %393 = vmatprep.subr.mxu0 0.0
    %394 = vmatpush2.msra.mxu0 0.0
    %395 = vmatprep.mubr.f32.mxu0 0.0
    %396 = vmatmul.mubr.f32.gmra.mxu0 %v214
    %v397 = vpop.f32.mrf.mxu0
    %v398 = vadd.f32 %v329, %v397
    %v399 = vpop.f32.mrf.mxu0
    %400 = vdwg.mxu0
    %vm401 = vcmask 64512
    %402 = vst.msk [vmem:[#allocation2] sm:$0xff] %vm401, %v305
    %v403 = vmax.f32 %v398, -20.0
    %v404 = vmin.f32 %v403, 2.0
    %405 = vst.msk [vmem:[#allocation4] sm:$0xff] %vm401, %v404
    // Predicated region
    $region38: #{tpu_custom_call.1} parent=1 // pred_check
      _
    $region39: #{tpu_custom_call.1} parent=1 // pred_check_branch
      %407 = sbr.rel (0) target = $region41
    $region40: #{tpu_custom_call.1} parent=1 // pred_region
      %s409 = ssub.s32 128, 128
      %410 = vsyncadd [#allocation3], %s409
      %s412 = sshll.u32 [#allocation2], 4
      %s413 = int_to_ptr.vmem [resolvable:$true] %s412
      %415 = dma.vmem_to_hbm [thread:$0]  %s413, 128, %s9, [#allocation3]
    $region41: #{tpu_custom_call.1} parent=1 // pred_fallthru
      _
    // Predicated region
    $region42: #{tpu_custom_call.1} parent=1 // pred_check
      _
    $region43: #{tpu_custom_call.1} parent=1 // pred_check_branch
      %417 = sbr.rel (0) target = $region45
    $region44: #{tpu_custom_call.1} parent=1 // pred_region
      %s419 = ssub.s32 128, 128
      %420 = vsyncadd [#allocation5], %s419
      %s422 = sshll.u32 [#allocation4], 4
      %s423 = int_to_ptr.vmem [resolvable:$true] %s422
      %425 = dma.vmem_to_hbm [thread:$0]  %s423, 128, %s10, [#allocation5]
    $region45: #{tpu_custom_call.1} parent=1 // pred_fallthru
      _
    // Predicated region
    $region46: #{tpu_custom_call.1} parent=1 // pred_check
      _
    $region47: #{tpu_custom_call.1} parent=1 // pred_check_branch
      %427 = sbr.rel (0) target = $region49
    $region48: #{tpu_custom_call.1} parent=1 // pred_region
      %428 = dma.done [#allocation3], 128
    $region49: #{tpu_custom_call.1} parent=1 // pred_fallthru
      _
    // Predicated region
    $region50: #{tpu_custom_call.1} parent=1 // pred_check
      _
    $region51: #{tpu_custom_call.1} parent=1 // pred_check_branch
      %430 = sbr.rel (0) target = $region53
    $region52: #{tpu_custom_call.1} parent=1 // pred_region
      %431 = dma.done [#allocation5], 128
    $region53: #{tpu_custom_call.1} parent=1 // pred_fallthru
      _
    %432 = vsyncpa [#allocation3], 1
    %433 = vsyncpa [#allocation5], 1

</llo_original>
